<compile_context>
chip_gen: v6e
topology: v6e:2x2x1
jax: 0.10.0
libtpu: 0.0.40
codegen_flags: <defaults>
</compile_context>

<pallas_src>
import functools
import math

import jax
import jax.numpy as jnp
import numpy as np
from jax.experimental import pallas as pl
from jax.experimental.pallas import tpu as pltpu


# ----------------------------------------------------------------------------
# Kernel: fused avg-pool (df x df, per frame) + channel linear.
# ----------------------------------------------------------------------------
def _anchor_proj2_kernel(x_ref, wexp_ref, b_ref, o_ref, *, df, C, w, row_width):
    # x_ref    : (TG, df*row_width)  df input H-rows per pooled row, flattened
    #                                (lane-dense; row_width = W*C = w*df*C).
    # wexp_ref : (df*C, C)  f32      weight.T tiled df times, pre-scaled 1/df^2.
    # b_ref    : (1, C)     f32      bias.
    # o_ref    : (TG, w*C)           lane-dense output block.
    #
    # 1) H-direction pooling: sum the df input rows. Lazy per-slice cast keeps
    #    (possibly bf16) loads packed and live ranges short.
    acc = x_ref[:, 0:row_width].astype(jnp.float32)
    for r in range(1, df):
        acc = acc + x_ref[:, r * row_width:(r + 1) * row_width].astype(jnp.float32)

    # 2) W-direction pooling + linear, fused on the MXU: for output pixel wi,
    #    its df*C packed inputs are the K dim of a (TG, df*C) @ (df*C, C)
    #    matmul against Wexp (pooling scale pre-folded into the weights).
    wexp = wexp_ref[...]
    b = b_ref[...]
    kw = df * C
    cols = []
    for wi in range(w):                     # w is small & static (trace-time)
        seg = acc[:, wi * kw:(wi + 1) * kw]
        cols.append(jnp.dot(seg, wexp, preferred_element_type=jnp.float32) + b)

    out = jnp.concatenate(cols, axis=-1)    # (TG, w*C) -> one dense wide store
    o_ref[...] = out.astype(o_ref.dtype)


def _pick_block_rows(G, row_bytes, target_bytes=4 << 20, max_rows=1024):
    """Fixed row-block size (need NOT divide G). Largest slab under the budget,
    rounded to a multiple of 8 sublanes; keep >= ~8 grid steps on big problems
    so the pipeline has depth and v7x's two TensorCores stay balanced."""
    cap = max(1, min(max_rows, int(target_bytes // max(row_bytes, 1))))
    if cap >= G:
        return G                                   # single block
    tg = max(8, (cap // 8) * 8)
    if G >= 64:
        balanced = max(8, ((-(-G // 8)) + 7) // 8 * 8)   # ~cdiv(G, 8), mult of 8
        tg = min(tg, balanced)
    return max(8, tg)


def anchor_projection2_pallas(x, wexp, bias, x_size, T, df):
    """x: (B, T*H*W, C) -> (B, T, H//df, W//df, C). Fused AvgPool2d(df)+Linear."""
    B, N, C = x.shape
    H, W = x_size
    assert N == T * H * W, (N, T, H, W)
    assert H % df == 0 and W % df == 0, "AvgPool2d(df) assumes df | H and df | W"
    h, w = H // df, W // df
    G = B * T * h                    # pooled output rows
    row_width = W * C                # one input H-row (= w * df * C)
    L = df * row_width               # input elements feeding one pooled row

    # Free row-major regrouping (no data movement): (B, T*H*W, C) == (G, L).
    x2 = x.reshape(G, L)

    wexp = jnp.asarray(wexp, jnp.float32)
    assert wexp.shape == (df * C, C), wexp.shape
    b2 = jnp.asarray(bias, jnp.float32).reshape(1, C)

    row_bytes = L * x.dtype.itemsize
    TG = _pick_block_rows(G, row_bytes)
    grid = (pl.cdiv(G, TG),)         # partial last block OK (rows independent)

    # VMEM budget: 2x double-buffered in/out blocks + f32 temporaries + weights.
    in_blk = TG * L * x.dtype.itemsize
    out_blk = TG * w * C * x.dtype.itemsize
    tmp_f32 = TG * row_width * 4
    need = 2 * in_blk + 2 * out_blk + 3 * tmp_f32 + wexp.size * 4 + (2 << 20)
    vmem_limit = int(min(max(need, 32 << 20), 48 << 20))

    kernel = functools.partial(_anchor_proj2_kernel,
                               df=df, C=C, w=w, row_width=row_width)

    out = pl.pallas_call(
        kernel,
        out_shape=jax.ShapeDtypeStruct((G, w * C), x.dtype),
        grid_spec=pltpu.PrefetchScalarGridSpec(
            num_scalar_prefetch=0,
            grid=grid,
            in_specs=[
                # TG pooled rows, full (lane-dense) trailing dim -> contiguous DMA.
                pl.BlockSpec((TG, L), lambda g: (g, 0)),
                # Grid-invariant weight / bias (tiny, kept in f32).
                pl.BlockSpec((df * C, C), lambda g: (0, 0)),
                pl.BlockSpec((1, C), lambda g: (0, 0)),
            ],
            out_specs=pl.BlockSpec((TG, w * C), lambda g: (g, 0)),
        ),
        compiler_params=pltpu.CompilerParams(
            dimension_semantics=("parallel",),   # independent blocks -> v7x 2xTC
            vmem_limit_bytes=vmem_limit,
        ),
    )(x2, wexp, b2)

    return out.reshape(B, T, h, w, C)


# ----------------------------------------------------------------------------
# Module wrapper (parameters + layout glue, matching AnchorProjection2.forward).
# ----------------------------------------------------------------------------
class AnchorProjection2JAX:
    def __init__(self, dim, anchor_window_down_factor, key=jax.random.PRNGKey(0)):
        self.dim = dim
        self.df = anchor_window_down_factor
        k1, k2 = jax.random.split(key)
        bound = 1.0 / math.sqrt(dim)     # nn.Linear default init range
        self.weight = jax.random.uniform(k1, (dim, dim), jnp.float32, -bound, bound)
        self.bias = jax.random.uniform(k2, (dim,), jnp.float32, -bound, bound)
        # Precomputed once (review): weight.T tiled df times along K and
        # pre-scaled by 1/df^2 -> the W-direction pooling rides the MXU K dim.
        self.wexp = jnp.tile(self.weight.T, (self.df, 1)) * (1.0 / float(self.df ** 2))
        self.bias_f32 = self.bias.astype(jnp.float32)
        # TODO(synk): feed x / produce output in bf16 (f32 accumulation stays
        # inside the kernel) if the surrounding model tolerates it — ~2x on HBM.

    def __call__(self, x, x_size):
        B, N, C = x.shape
        assert C == self.dim
        T = N // (x_size[0] * x_size[1])
        return anchor_projection2_pallas(x, self.wexp, self.bias_f32, x_size, T, self.df)


# ----------------------------------------------------------------------------
# Pure-JAX reference for a correctness sanity check.
# ----------------------------------------------------------------------------
def _reference(x, weight, bias, x_size, T, df):
    B, N, C = x.shape
    H, W = x_size
    h, w = H // df, W // df
    pooled = x.reshape(B, T, h, df, w, df, C).mean(axis=(3, 5))     # AvgPool2d(df)
    y = jnp.einsum("bthwc,dc->bthwd", pooled, weight,
                   precision=jax.lax.Precision.HIGHEST) + bias      # Linear
    return y                                                        # (B,T,h,w,C)


if __name__ == "__main__":
    # Small configuration consistent with the module.
    B, T, H, W = 2, 2, 16, 16
    dim, df = 32, 2

    key = jax.random.PRNGKey(0)
    kx, kp = jax.random.split(key)
    x = jax.random.normal(kx, (B, T * H * W, dim), jnp.float32)

    module = AnchorProjection2JAX(dim=dim, anchor_window_down_factor=df, key=kp)

    out = jax.block_until_ready(module(x, (H, W)))
    assert out.shape == (B, T, H // df, W // df, dim), out.shape

    want = _reference(x, module.weight, module.bias, (H, W), T, df)
    np.testing.assert_allclose(np.asarray(out), np.asarray(want), rtol=2e-3, atol=2e-3)

    print("KERNEL_OK")
</pallas_src>

<mosaic_0001>
module attributes {stable_mosaic.version = 11 : i64} {
  func.func @_anchor_proj2_kernel(%arg0: i32, %arg1: memref<32x1024xf32, #tpu.memory_space<vmem>>, %arg2: memref<64x32xf32, #tpu.memory_space<vmem>>, %arg3: memref<1x32xf32, #tpu.memory_space<vmem>>, %arg4: memref<32x256xf32, #tpu.memory_space<vmem>>) attributes {dimension_semantics = [#tpu.dimension_semantics<parallel>], iteration_bounds = array<i64: 1>, scalar_prefetch = 0 : i64, scratch_operands = 0 : i64, tpu.core_type = #tpu.core_type<tc>, window_params = [{transform_indices = @transform_0, window_bounds = array<i64: 32, 1024>}, {pipeline_mode = #tpu.pipeline_mode<synchronous>, transform_indices = @transform_1, window_bounds = array<i64: 64, 32>}, {pipeline_mode = #tpu.pipeline_mode<synchronous>, transform_indices = @transform_2, window_bounds = array<i64: 1, 32>}, {transform_indices = @transform_3, window_bounds = array<i64: 32, 256>}]} {
    %c0 = arith.constant 0 : index
    %c0_0 = arith.constant 0 : index
    %0 = vector.load %arg1[%c0, %c0_0] : memref<32x1024xf32, #tpu.memory_space<vmem>>, vector<32x512xf32>
    %c0_1 = arith.constant 0 : index
    %c512 = arith.constant 512 : index
    %1 = vector.load %arg1[%c0_1, %c512] : memref<32x1024xf32, #tpu.memory_space<vmem>>, vector<32x512xf32>
    %2 = arith.addf %0, %1 : vector<32x512xf32>
    %c0_2 = arith.constant 0 : index
    %c0_3 = arith.constant 0 : index
    %3 = vector.load %arg2[%c0_2, %c0_3] : memref<64x32xf32, #tpu.memory_space<vmem>>, vector<64x32xf32>
    %c0_4 = arith.constant 0 : index
    %c0_5 = arith.constant 0 : index
    %4 = vector.load %arg3[%c0_4, %c0_5] : memref<1x32xf32, #tpu.memory_space<vmem>>, vector<1x32xf32>
    %5 = vector.extract_strided_slice %2 {offsets = [0, 0], sizes = [32, 64], strides = [1, 1]} : vector<32x512xf32> to vector<32x64xf32>
    %cst = arith.constant dense<0.000000e+00> : vector<32x32xf32>
    %6 = tpu.matmul %5, %3, %cst {dimension_numbers = #tpu.dot_dimension_numbers<[1], [0], [0], [1], [0, 0, 1, 1], [], []>} : vector<32x64xf32>, vector<64x32xf32>, vector<32x32xf32> -> vector<32x32xf32>
    %7 = vector.broadcast %4 : vector<1x32xf32> to vector<32x32xf32>
    %8 = arith.addf %6, %7 : vector<32x32xf32>
    %9 = vector.extract_strided_slice %2 {offsets = [0, 64], sizes = [32, 64], strides = [1, 1]} : vector<32x512xf32> to vector<32x64xf32>
    %cst_6 = arith.constant dense<0.000000e+00> : vector<32x32xf32>
    %10 = tpu.matmul %9, %3, %cst_6 {dimension_numbers = #tpu.dot_dimension_numbers<[1], [0], [0], [1], [0, 0, 1, 1], [], []>} : vector<32x64xf32>, vector<64x32xf32>, vector<32x32xf32> -> vector<32x32xf32>
    %11 = vector.broadcast %4 : vector<1x32xf32> to vector<32x32xf32>
    %12 = arith.addf %10, %11 : vector<32x32xf32>
    %13 = vector.extract_strided_slice %2 {offsets = [0, 128], sizes = [32, 64], strides = [1, 1]} : vector<32x512xf32> to vector<32x64xf32>
    %cst_7 = arith.constant dense<0.000000e+00> : vector<32x32xf32>
    %14 = tpu.matmul %13, %3, %cst_7 {dimension_numbers = #tpu.dot_dimension_numbers<[1], [0], [0], [1], [0, 0, 1, 1], [], []>} : vector<32x64xf32>, vector<64x32xf32>, vector<32x32xf32> -> vector<32x32xf32>
    %15 = vector.broadcast %4 : vector<1x32xf32> to vector<32x32xf32>
    %16 = arith.addf %14, %15 : vector<32x32xf32>
    %17 = vector.extract_strided_slice %2 {offsets = [0, 192], sizes = [32, 64], strides = [1, 1]} : vector<32x512xf32> to vector<32x64xf32>
    %cst_8 = arith.constant dense<0.000000e+00> : vector<32x32xf32>
    %18 = tpu.matmul %17, %3, %cst_8 {dimension_numbers = #tpu.dot_dimension_numbers<[1], [0], [0], [1], [0, 0, 1, 1], [], []>} : vector<32x64xf32>, vector<64x32xf32>, vector<32x32xf32> -> vector<32x32xf32>
    %19 = vector.broadcast %4 : vector<1x32xf32> to vector<32x32xf32>
    %20 = arith.addf %18, %19 : vector<32x32xf32>
    %21 = vector.extract_strided_slice %2 {offsets = [0, 256], sizes = [32, 64], strides = [1, 1]} : vector<32x512xf32> to vector<32x64xf32>
    %cst_9 = arith.constant dense<0.000000e+00> : vector<32x32xf32>
    %22 = tpu.matmul %21, %3, %cst_9 {dimension_numbers = #tpu.dot_dimension_numbers<[1], [0], [0], [1], [0, 0, 1, 1], [], []>} : vector<32x64xf32>, vector<64x32xf32>, vector<32x32xf32> -> vector<32x32xf32>
    %23 = vector.broadcast %4 : vector<1x32xf32> to vector<32x32xf32>
    %24 = arith.addf %22, %23 : vector<32x32xf32>
    %25 = vector.extract_strided_slice %2 {offsets = [0, 320], sizes = [32, 64], strides = [1, 1]} : vector<32x512xf32> to vector<32x64xf32>
    %cst_10 = arith.constant dense<0.000000e+00> : vector<32x32xf32>
    %26 = tpu.matmul %25, %3, %cst_10 {dimension_numbers = #tpu.dot_dimension_numbers<[1], [0], [0], [1], [0, 0, 1, 1], [], []>} : vector<32x64xf32>, vector<64x32xf32>, vector<32x32xf32> -> vector<32x32xf32>
    %27 = vector.broadcast %4 : vector<1x32xf32> to vector<32x32xf32>
    %28 = arith.addf %26, %27 : vector<32x32xf32>
    %29 = vector.extract_strided_slice %2 {offsets = [0, 384], sizes = [32, 64], strides = [1, 1]} : vector<32x512xf32> to vector<32x64xf32>
    %cst_11 = arith.constant dense<0.000000e+00> : vector<32x32xf32>
    %30 = tpu.matmul %29, %3, %cst_11 {dimension_numbers = #tpu.dot_dimension_numbers<[1], [0], [0], [1], [0, 0, 1, 1], [], []>} : vector<32x64xf32>, vector<64x32xf32>, vector<32x32xf32> -> vector<32x32xf32>
    %31 = vector.broadcast %4 : vector<1x32xf32> to vector<32x32xf32>
    %32 = arith.addf %30, %31 : vector<32x32xf32>
    %33 = vector.extract_strided_slice %2 {offsets = [0, 448], sizes = [32, 64], strides = [1, 1]} : vector<32x512xf32> to vector<32x64xf32>
    %cst_12 = arith.constant dense<0.000000e+00> : vector<32x32xf32>
    %34 = tpu.matmul %33, %3, %cst_12 {dimension_numbers = #tpu.dot_dimension_numbers<[1], [0], [0], [1], [0, 0, 1, 1], [], []>} : vector<32x64xf32>, vector<64x32xf32>, vector<32x32xf32> -> vector<32x32xf32>
    %35 = vector.broadcast %4 : vector<1x32xf32> to vector<32x32xf32>
    %36 = arith.addf %34, %35 : vector<32x32xf32>
    %37 = tpu.concatenate %8, %12, %16, %20, %24, %28, %32, %36 in 1 : vector<32x32xf32>, vector<32x32xf32>, vector<32x32xf32>, vector<32x32xf32>, vector<32x32xf32>, vector<32x32xf32>, vector<32x32xf32>, vector<32x32xf32> -> vector<32x256xf32>
    %c0_13 = arith.constant 0 : index
    %c0_14 = arith.constant 0 : index
    %38 = vector.load %arg4[%c0_13, %c0_14] : memref<32x256xf32, #tpu.memory_space<vmem>>, vector<32x256xf32>
    tpu.vector_store %arg4[%c0_13, %c0_14], %37 {strides = array<i32>} : memref<32x256xf32, #tpu.memory_space<vmem>>, vector<32x256xf32>,
    return
  }
  func.func @transform_0(%arg0: i32) -> (i32, i32) {
    %c0_i32 = arith.constant 0 : i32
    %c0_i32_0 = arith.constant 0 : i32
    return %arg0, %c0_i32 : i32, i32
  }
  func.func @transform_1(%arg0: i32) -> (i32, i32) {
    %c0_i32 = arith.constant 0 : i32
    %c0_i32_0 = arith.constant 0 : i32
    %c0_i32_1 = arith.constant 0 : i32
    return %c0_i32, %c0_i32_0 : i32, i32
  }
  func.func @transform_2(%arg0: i32) -> (i32, i32) {
    %c0_i32 = arith.constant 0 : i32
    %c0_i32_0 = arith.constant 0 : i32
    %c0_i32_1 = arith.constant 0 : i32
    return %c0_i32, %c0_i32_0 : i32, i32
  }
  func.func @transform_3(%arg0: i32) -> (i32, i32) {
    %c0_i32 = arith.constant 0 : i32
    %c0_i32_0 = arith.constant 0 : i32
    return %arg0, %c0_i32 : i32, i32
  }
}

</mosaic_0001>

<llo_original>
// kernel: tpu_custom_call.1
$region0: #{tpu_custom_call.1}
  #allocation0 [shape = 'u32[]', space=smem, size = 0x4, offset = 0x4, fixed_abs, tag = 'smem constant byte address 0x4 - core index']
  #allocation1 [shape = 'u32[144,128]{1,0:T(1,128)}', space=vmem, size = 0x12000, scoped, tag = 'internal scratch']
  %s0 = inlined_call_operand.hbm [shape: f32[32,1024], index: 0, kind: input, shape index: {}]
  %s1 = inlined_call_operand.vmem [shape: f32[64,32], index: 1, kind: input, shape index: {}]
  %s2 = inlined_call_operand.vmem [shape: f32[1,32], index: 2, kind: input, shape index: {}]
  %s3 = inlined_call_operand.hbm [shape: f32[32,256], index: 3, kind: output, shape index: {}]
  %s4 = sld [smem:[#allocation0]]
  $region26: #{tpu_custom_call.1} parent=0
    _
  %s6 = ssub.s32 1, %s4
  %s7 = scalar_select 0, %s6, %s4
  $region1: #{tpu_custom_call.1} parent=0
    #allocation2 [shape = 'u8[131072]{0}', space=vmem, size = 0x20000, scoped, tag = 'input window, operand 0, single buffered']
    #allocation3 [shape = 's32[1]{0}', space=sflag, size = 0x4, scoped, tag = 'scoped memory for tpu_custom_call.1']
    #allocation4 [shape = 's32[1]{0}', space=sflag, size = 0x4, scoped, tag = 'scoped memory for tpu_custom_call.1']
    #allocation5 [shape = 'u8[32768]{0}', space=vmem, size = 0x8000, scoped, tag = 'output window, operand 0, single buffered']
    %8 = vsyncpa [#allocation3], 0
    %9 = vsyncpa [#allocation4], 0
    // Predicated region
    $region2: #{tpu_custom_call.1} parent=1 // pred_check
      _
    $region3: #{tpu_custom_call.1} parent=1 // pred_check_branch
      %11 = sbr.rel (0) target = $region5
    $region4: #{tpu_custom_call.1} parent=1 // pred_region
      %s13 = ssub.s32 4096, 4096
      %14 = vsyncadd [#allocation3], %s13
      %s15 = sshll.u32 [#allocation2], 4
      %s16 = int_to_ptr.vmem [resolvable:$true] %s15
      %21 = dma.hbm_to_vmem [thread:$0]  %s0, 4096, %s16, [#allocation3], 1024, 1024, 64
    $region5: #{tpu_custom_call.1} parent=1 // pred_fallthru
      _
    // Predicated region
    $region6: #{tpu_custom_call.1} parent=1 // pred_check
      _
    $region7: #{tpu_custom_call.1} parent=1 // pred_check_branch
      %23 = sbr.rel (0) target = $region9
    $region8: #{tpu_custom_call.1} parent=1 // pred_region
      _
    $region9: #{tpu_custom_call.1} parent=1 // pred_fallthru
      _
    // Predicated region
    $region10: #{tpu_custom_call.1} parent=1 // pred_check
      _
    $region11: #{tpu_custom_call.1} parent=1 // pred_check_branch
      %25 = sbr.rel (0) target = $region13
    $region12: #{tpu_custom_call.1} parent=1 // pred_region
      _
    $region13: #{tpu_custom_call.1} parent=1 // pred_fallthru
      _
    // Predicated region
    $region14: #{tpu_custom_call.1} parent=1 // pred_check
      _
    $region15: #{tpu_custom_call.1} parent=1 // pred_check_branch
      %27 = sbr.rel (0) target = $region17
    $region16: #{tpu_custom_call.1} parent=1 // pred_region
      %28 = dma.done [#allocation3], 4096
    $region17: #{tpu_custom_call.1} parent=1 // pred_fallthru
      _
    %v29 = vld [vmem:[#allocation2] sm:$0xff]
    %v30 = vld [vmem:[#allocation2 + $0x8] sm:$0xff]
    %v31 = vld [vmem:[#allocation2 + $0x10] sm:$0xff]
    %v32 = vld [vmem:[#allocation2 + $0x18] sm:$0xff]
    %v33 = vld [vmem:[#allocation2 + $0x40] sm:$0xff]
    %v34 = vld [vmem:[#allocation2 + $0x48] sm:$0xff]
    %v35 = vld [vmem:[#allocation2 + $0x50] sm:$0xff]
    %v36 = vld [vmem:[#allocation2 + $0x58] sm:$0xff]
    %v37 = vld [vmem:[#allocation2 + $0x80] sm:$0xff]
    %v38 = vld [vmem:[#allocation2 + $0x88] sm:$0xff]
    %v39 = vld [vmem:[#allocation2 + $0x90] sm:$0xff]
    %v40 = vld [vmem:[#allocation2 + $0x98] sm:$0xff]
    %v41 = vld [vmem:[#allocation2 + $0xc0] sm:$0xff]
    %v42 = vld [vmem:[#allocation2 + $0xc8] sm:$0xff]
    %v43 = vld [vmem:[#allocation2 + $0xd0] sm:$0xff]
    %v44 = vld [vmem:[#allocation2 + $0xd8] sm:$0xff]
    %v45 = vld [vmem:[#allocation2 + $0x20] sm:$0xff]
    %v46 = vld [vmem:[#allocation2 + $0x28] sm:$0xff]
    %v47 = vld [vmem:[#allocation2 + $0x30] sm:$0xff]
    %v48 = vld [vmem:[#allocation2 + $0x38] sm:$0xff]
    %v49 = vld [vmem:[#allocation2 + $0x60] sm:$0xff]
    %v50 = vld [vmem:[#allocation2 + $0x68] sm:$0xff]
    %v51 = vld [vmem:[#allocation2 + $0x70] sm:$0xff]
    %v52 = vld [vmem:[#allocation2 + $0x78] sm:$0xff]
    %v53 = vld [vmem:[#allocation2 + $0xa0] sm:$0xff]
    %v54 = vld [vmem:[#allocation2 + $0xa8] sm:$0xff]
    %v55 = vld [vmem:[#allocation2 + $0xb0] sm:$0xff]
    %v56 = vld [vmem:[#allocation2 + $0xb8] sm:$0xff]
    %v57 = vld [vmem:[#allocation2 + $0xe0] sm:$0xff]
    %v58 = vld [vmem:[#allocation2 + $0xe8] sm:$0xff]
    %v59 = vld [vmem:[#allocation2 + $0xf0] sm:$0xff]
    %v60 = vld [vmem:[#allocation2 + $0xf8] sm:$0xff]
    %v61 = vadd.f32 %v29, %v45
    %v62 = vadd.f32 %v30, %v46
    %v63 = vadd.f32 %v31, %v47
    %v64 = vadd.f32 %v32, %v48
    %v65 = vadd.f32 %v33, %v49
    %v66 = vadd.f32 %v34, %v50
    %v67 = vadd.f32 %v35, %v51
    %v68 = vadd.f32 %v36, %v52
    %v69 = vadd.f32 %v37, %v53
    %v70 = vadd.f32 %v38, %v54
    %v71 = vadd.f32 %v39, %v55
    %v72 = vadd.f32 %v40, %v56
    %v73 = vadd.f32 %v41, %v57
    %v74 = vadd.f32 %v42, %v58
    %v75 = vadd.f32 %v43, %v59
    %v76 = vadd.f32 %v44, %v60
    %v77 = vld [vmem:[%s1] sm:$0xff]
    %v78 = vld [vmem:[%s1 + $0x8] sm:$0xff]
    %v79 = vld [vmem:[%s1 + $0x10] sm:$0xff]
    %v80 = vld [vmem:[%s1 + $0x18] sm:$0xff]
    %v81 = vld [vmem:[%s1 + $0x20] sm:$0xff]
    %v82 = vld [vmem:[%s1 + $0x28] sm:$0xff]
    %v83 = vld [vmem:[%s1 + $0x30] sm:$0xff]
    %v84 = vld [vmem:[%s1 + $0x38] sm:$0xff]
    %v85 = vld [vmem:[%s2] sm:$0x1]
    %v87 = vlaneseq
    %v88 = vshrl.u32 %v87, 7
    %v89 = vsub.s32 0, %v88
    %v90 = vrot.slane %v85, %v89
    %vm92 = vcmask 523264
    %v94 = vsel %vm92, %v61, 0
    %v97 = vsel %vm92, %v65, 0
    %v100 = vsel %vm92, %v69, 0
    %v103 = vsel %vm92, %v73, 0
    %105 = vmatprep.subr.mxu0 0.0
    %106 = vmatpush1.msra.mxu0 0.0
    %107 = vmatprep.subr.mxu0 0.0
    %108 = vmatpush1.msra.mxu0 0.0
    %109 = vmatprep.subr.mxu0 0.0
    %110 = vmatpush1.msra.mxu0 0.0
    %111 = vmatprep.subr.mxu0 0.0
    %112 = vmatpush1.msra.mxu0 0.0
    %113 = vmatprep.subr.mxu0 0.0
    %114 = vmatpush1.msra.mxu0 0.0
    %115 = vmatprep.subr.mxu0 0.0
    %116 = vmatpush1.msra.mxu0 0.0
    %117 = vmatprep.subr.mxu0 0.0
    %118 = vmatpush1.msra.mxu0 0.0
    %119 = vmatprep.subr.mxu0 0.0
    %120 = vmatpush1.msra.mxu0 0.0
    %121 = vmatprep.subr.mxu0 0.0
    %122 = vmatpush1.msra.mxu0 %v84
    %123 = vmatprep.subr.mxu0 0.0
    %124 = vmatpush1.msra.mxu0 %v83
    %125 = vmatprep.subr.mxu0 0.0
    %126 = vmatpush1.msra.mxu0 %v82
    %127 = vmatprep.subr.mxu0 0.0
    %128 = vmatpush1.msra.mxu0 %v81
    %129 = vmatprep.subr.mxu0 0.0
    %130 = vmatpush1.msra.mxu0 %v80
    %131 = vmatprep.subr.mxu0 0.0
    %132 = vmatpush1.msra.mxu0 %v79
    %133 = vmatprep.subr.mxu0 0.0
    %134 = vmatpush1.msra.mxu0 %v78
    %135 = vmatprep.subr.mxu0 0.0
    %136 = vmatpush1.msra.mxu0 %v77
    %137 = vmatprep.subr.mxu0 0.0
    %138 = vmatpush2.msra.mxu0 0.0
    %139 = vmatprep.subr.mxu0 0.0
    %140 = vmatpush2.msra.mxu0 0.0
    %141 = vmatprep.subr.mxu0 0.0
    %142 = vmatpush2.msra.mxu0 0.0
    %143 = vmatprep.subr.mxu0 0.0
    %144 = vmatpush2.msra.mxu0 0.0
    %145 = vmatprep.subr.mxu0 0.0
    %146 = vmatpush2.msra.mxu0 0.0
    %147 = vmatprep.subr.mxu0 0.0
    %148 = vmatpush2.msra.mxu0 0.0
    %149 = vmatprep.subr.mxu0 0.0
    %150 = vmatpush2.msra.mxu0 0.0
    %151 = vmatprep.subr.mxu0 0.0
    %152 = vmatpush2.msra.mxu0 0.0
    %153 = vmatprep.subr.mxu0 0.0
    %154 = vmatpush2.msra.mxu0 0.0
    %155 = vmatprep.subr.mxu0 0.0
    %156 = vmatpush2.msra.mxu0 0.0
    %157 = vmatprep.subr.mxu0 0.0
    %158 = vmatpush2.msra.mxu0 0.0
    %159 = vmatprep.subr.mxu0 0.0
    %160 = vmatpush2.msra.mxu0 0.0
    %161 = vmatprep.subr.mxu0 0.0
    %162 = vmatpush2.msra.mxu0 0.0
    %163 = vmatprep.subr.mxu0 0.0
    %164 = vmatpush2.msra.mxu0 0.0
    %165 = vmatprep.subr.mxu0 0.0
    %166 = vmatpush2.msra.mxu0 0.0
    %167 = vmatprep.subr.mxu0 0.0
    %168 = vmatpush2.msra.mxu0 0.0
    %169 = vmatprep.mubr.f32.mxu0 0.0
    %170 = vmatmul.mubr.f32.gmra.mxu0 %v94
    %v171 = vpop.f32.mrf.mxu0
    %v172 = vadd.f32 %v90, %v171
    %v173 = vpop.f32.mrf.mxu0
    %174 = vmatprep.mubr.f32.mxu0 0.0
    %175 = vmatmul.mubr.f32.gmra.mxu0 %v97
    %v176 = vpop.f32.mrf.mxu0
    %v177 = vadd.f32 %v90, %v176
    %v178 = vpop.f32.mrf.mxu0
    %179 = vmatprep.mubr.f32.mxu0 0.0
    %180 = vmatmul.mubr.f32.gmra.mxu0 %v100
    %v181 = vpop.f32.mrf.mxu0
    %v182 = vadd.f32 %v90, %v181
    %v183 = vpop.f32.mrf.mxu0
    %184 = vmatprep.mubr.f32.mxu0 0.0
    %185 = vmatmul.mubr.f32.gmra.mxu0 %v103
    %v186 = vpop.f32.mrf.mxu0
    %v187 = vadd.f32 %v90, %v186
    %v188 = vpop.f32.mrf.mxu0
    %189 = vdwg.mxu0
    %190 = vrot.lane.b32.xlu0 %v61, 64
    %v191 = vpop.permute.xlu0 %190
    %192 = vrot.lane.b32.xlu0 %v65, 64
    %v193 = vpop.permute.xlu0 %192
    %194 = vrot.lane.b32.xlu0 %v69, 64
    %v195 = vpop.permute.xlu0 %194
    %196 = vrot.lane.b32.xlu0 %v73, 64
    %v197 = vpop.permute.xlu0 %196
    %v198 = vsel %vm92, %v191, 0
    %v200 = vsel %vm92, %v193, 0
    %v202 = vsel %vm92, %v195, 0
    %v204 = vsel %vm92, %v197, 0
    %206 = vmatprep.subr.mxu0 0.0
    %207 = vmatpush1.msra.mxu0 0.0
    %208 = vmatprep.subr.mxu0 0.0
    %209 = vmatpush1.msra.mxu0 0.0
    %210 = vmatprep.subr.mxu0 0.0
    %211 = vmatpush1.msra.mxu0 0.0
    %212 = vmatprep.subr.mxu0 0.0
    %213 = vmatpush1.msra.mxu0 0.0
    %214 = vmatprep.subr.mxu0 0.0
    %215 = vmatpush1.msra.mxu0 0.0
    %216 = vmatprep.subr.mxu0 0.0
    %217 = vmatpush1.msra.mxu0 0.0
    %218 = vmatprep.subr.mxu0 0.0
    %219 = vmatpush1.msra.mxu0 0.0
    %220 = vmatprep.subr.mxu0 0.0
    %221 = vmatpush1.msra.mxu0 0.0
    %222 = vmatprep.subr.mxu0 0.0
    %223 = vmatpush1.msra.mxu0 %v84
    %224 = vmatprep.subr.mxu0 0.0
    %225 = vmatpush1.msra.mxu0 %v83
    %226 = vmatprep.subr.mxu0 0.0
    %227 = vmatpush1.msra.mxu0 %v82
    %228 = vmatprep.subr.mxu0 0.0
    %229 = vmatpush1.msra.mxu0 %v81
    %230 = vmatprep.subr.mxu0 0.0
    %231 = vmatpush1.msra.mxu0 %v80
    %232 = vmatprep.subr.mxu0 0.0
    %233 = vmatpush1.msra.mxu0 %v79
    %234 = vmatprep.subr.mxu0 0.0
    %235 = vmatpush1.msra.mxu0 %v78
    %236 = vmatprep.subr.mxu0 0.0
    %237 = vmatpush1.msra.mxu0 %v77
    %238 = vmatprep.subr.mxu0 0.0
    %239 = vmatpush2.msra.mxu0 0.0
    %240 = vmatprep.subr.mxu0 0.0
    %241 = vmatpush2.msra.mxu0 0.0
    %242 = vmatprep.subr.mxu0 0.0
    %243 = vmatpush2.msra.mxu0 0.0
    %244 = vmatprep.subr.mxu0 0.0
    %245 = vmatpush2.msra.mxu0 0.0
    %246 = vmatprep.subr.mxu0 0.0
    %247 = vmatpush2.msra.mxu0 0.0
    %248 = vmatprep.subr.mxu0 0.0
    %249 = vmatpush2.msra.mxu0 0.0
    %250 = vmatprep.subr.mxu0 0.0
    %251 = vmatpush2.msra.mxu0 0.0
    %252 = vmatprep.subr.mxu0 0.0
    %253 = vmatpush2.msra.mxu0 0.0
    %254 = vmatprep.subr.mxu0 0.0
    %255 = vmatpush2.msra.mxu0 0.0
    %256 = vmatprep.subr.mxu0 0.0
    %257 = vmatpush2.msra.mxu0 0.0
    %258 = vmatprep.subr.mxu0 0.0
    %259 = vmatpush2.msra.mxu0 0.0
    %260 = vmatprep.subr.mxu0 0.0
    %261 = vmatpush2.msra.mxu0 0.0
    %262 = vmatprep.subr.mxu0 0.0
    %263 = vmatpush2.msra.mxu0 0.0
    %264 = vmatprep.subr.mxu0 0.0
    %265 = vmatpush2.msra.mxu0 0.0
    %266 = vmatprep.subr.mxu0 0.0
    %267 = vmatpush2.msra.mxu0 0.0
    %268 = vmatprep.subr.mxu0 0.0
    %269 = vmatpush2.msra.mxu0 0.0
    %270 = vmatprep.mubr.f32.mxu0 0.0
    %271 = vmatmul.mubr.f32.gmra.mxu0 %v198
    %v272 = vpop.f32.mrf.mxu0
    %v273 = vadd.f32 %v90, %v272
    %v274 = vpop.f32.mrf.mxu0
    %275 = vmatprep.mubr.f32.mxu0 0.0
    %276 = vmatmul.mubr.f32.gmra.mxu0 %v200
    %v277 = vpop.f32.mrf.mxu0
    %v278 = vadd.f32 %v90, %v277
    %v279 = vpop.f32.mrf.mxu0
    %280 = vmatprep.mubr.f32.mxu0 0.0
    %281 = vmatmul.mubr.f32.gmra.mxu0 %v202
    %v282 = vpop.f32.mrf.mxu0
    %v283 = vadd.f32 %v90, %v282
    %v284 = vpop.f32.mrf.mxu0
    %285 = vmatprep.mubr.f32.mxu0 0.0
    %286 = vmatmul.mubr.f32.gmra.mxu0 %v204
    %v287 = vpop.f32.mrf.mxu0
    %v288 = vadd.f32 %v90, %v287
    %v289 = vpop.f32.mrf.mxu0
    %290 = vdwg.mxu0
    %v292 = vsel %vm92, %v62, 0
    %v295 = vsel %vm92, %v66, 0
    %v298 = vsel %vm92, %v70, 0
    %v301 = vsel %vm92, %v74, 0
    %303 = vmatprep.subr.mxu0 0.0
    %304 = vmatpush1.msra.mxu0 0.0
    %305 = vmatprep.subr.mxu0 0.0
    %306 = vmatpush1.msra.mxu0 0.0
    %307 = vmatprep.subr.mxu0 0.0
    %308 = vmatpush1.msra.mxu0 0.0
    %309 = vmatprep.subr.mxu0 0.0
    %310 = vmatpush1.msra.mxu0 0.0
    %311 = vmatprep.subr.mxu0 0.0
    %312 = vmatpush1.msra.mxu0 0.0
    %313 = vmatprep.subr.mxu0 0.0
    %314 = vmatpush1.msra.mxu0 0.0
    %315 = vmatprep.subr.mxu0 0.0
    %316 = vmatpush1.msra.mxu0 0.0
    %317 = vmatprep.subr.mxu0 0.0
    %318 = vmatpush1.msra.mxu0 0.0
    %319 = vmatprep.subr.mxu0 0.0
    %320 = vmatpush1.msra.mxu0 %v84
    %321 = vmatprep.subr.mxu0 0.0
    %322 = vmatpush1.msra.mxu0 %v83
    %323 = vmatprep.subr.mxu0 0.0
    %324 = vmatpush1.msra.mxu0 %v82
    %325 = vmatprep.subr.mxu0 0.0
    %326 = vmatpush1.msra.mxu0 %v81
    %327 = vmatprep.subr.mxu0 0.0
    %328 = vmatpush1.msra.mxu0 %v80
    %329 = vmatprep.subr.mxu0 0.0
    %330 = vmatpush1.msra.mxu0 %v79
    %331 = vmatprep.subr.mxu0 0.0
    %332 = vmatpush1.msra.mxu0 %v78
    %333 = vmatprep.subr.mxu0 0.0
    %334 = vmatpush1.msra.mxu0 %v77
    %335 = vmatprep.subr.mxu0 0.0
    %336 = vmatpush2.msra.mxu0 0.0
    %337 = vmatprep.subr.mxu0 0.0
    %338 = vmatpush2.msra.mxu0 0.0
    %339 = vmatprep.subr.mxu0 0.0
    %340 = vmatpush2.msra.mxu0 0.0
    %341 = vmatprep.subr.mxu0 0.0
    %342 = vmatpush2.msra.mxu0 0.0
    %343 = vmatprep.subr.mxu0 0.0
    %344 = vmatpush2.msra.mxu0 0.0
    %345 = vmatprep.subr.mxu0 0.0
    %346 = vmatpush2.msra.mxu0 0.0
    %347 = vmatprep.subr.mxu0 0.0
    %348 = vmatpush2.msra.mxu0 0.0
    %349 = vmatprep.subr.mxu0 0.0
    %350 = vmatpush2.msra.mxu0 0.0
    %351 = vmatprep.subr.mxu0 0.0
    %352 = vmatpush2.msra.mxu0 0.0
    %353 = vmatprep.subr.mxu0 0.0
    %354 = vmatpush2.msra.mxu0 0.0
    %355 = vmatprep.subr.mxu0 0.0
    %356 = vmatpush2.msra.mxu0 0.0
    %357 = vmatprep.subr.mxu0 0.0
    %358 = vmatpush2.msra.mxu0 0.0
    %359 = vmatprep.subr.mxu0 0.0
    %360 = vmatpush2.msra.mxu0 0.0
    %361 = vmatprep.subr.mxu0 0.0
    %362 = vmatpush2.msra.mxu0 0.0
    %363 = vmatprep.subr.mxu0 0.0
    %364 = vmatpush2.msra.mxu0 0.0
    %365 = vmatprep.subr.mxu0 0.0
    %366 = vmatpush2.msra.mxu0 0.0
    %367 = vmatprep.mubr.f32.mxu0 0.0
    %368 = vmatmul.mubr.f32.gmra.mxu0 %v292
    %v369 = vpop.f32.mrf.mxu0
    %v370 = vadd.f32 %v90, %v369
    %v371 = vpop.f32.mrf.mxu0
    %372 = vmatprep.mubr.f32.mxu0 0.0
    %373 = vmatmul.mubr.f32.gmra.mxu0 %v295
    %v374 = vpop.f32.mrf.mxu0
    %v375 = vadd.f32 %v90, %v374
    %v376 = vpop.f32.mrf.mxu0
    %377 = vmatprep.mubr.f32.mxu0 0.0
    %378 = vmatmul.mubr.f32.gmra.mxu0 %v298
    %v379 = vpop.f32.mrf.mxu0
    %v380 = vadd.f32 %v90, %v379
    %v381 = vpop.f32.mrf.mxu0
    %382 = vmatprep.mubr.f32.mxu0 0.0
    %383 = vmatmul.mubr.f32.gmra.mxu0 %v301
    %v384 = vpop.f32.mrf.mxu0
    %v385 = vadd.f32 %v90, %v384
    %v386 = vpop.f32.mrf.mxu0
    %387 = vdwg.mxu0
    %388 = vrot.lane.b32.xlu0 %v62, 64
    %v389 = vpop.permute.xlu0 %388
    %390 = vrot.lane.b32.xlu0 %v66, 64
    %v391 = vpop.permute.xlu0 %390
    %392 = vrot.lane.b32.xlu0 %v70, 64
    %v393 = vpop.permute.xlu0 %392
    %394 = vrot.lane.b32.xlu0 %v74, 64
    %v395 = vpop.permute.xlu0 %394
    %v396 = vsel %vm92, %v389, 0
    %v398 = vsel %vm92, %v391, 0
    %v400 = vsel %vm92, %v393, 0
    %v402 = vsel %vm92, %v395, 0
    %404 = vmatprep.subr.mxu0 0.0
    %405 = vmatpush1.msra.mxu0 0.0
    %406 = vmatprep.subr.mxu0 0.0
    %407 = vmatpush1.msra.mxu0 0.0
    %408 = vmatprep.subr.mxu0 0.0
    %409 = vmatpush1.msra.mxu0 0.0
    %410 = vmatprep.subr.mxu0 0.0
    %411 = vmatpush1.msra.mxu0 0.0
    %412 = vmatprep.subr.mxu0 0.0
    %413 = vmatpush1.msra.mxu0 0.0
    %414 = vmatprep.subr.mxu0 0.0
    %415 = vmatpush1.msra.mxu0 0.0
    %416 = vmatprep.subr.mxu0 0.0
    %417 = vmatpush1.msra.mxu0 0.0
    %418 = vmatprep.subr.mxu0 0.0
    %419 = vmatpush1.msra.mxu0 0.0
    %420 = vmatprep.subr.mxu0 0.0
    %421 = vmatpush1.msra.mxu0 %v84
    %422 = vmatprep.subr.mxu0 0.0
    %423 = vmatpush1.msra.mxu0 %v83
    %424 = vmatprep.subr.mxu0 0.0
    %425 = vmatpush1.msra.mxu0 %v82
    %426 = vmatprep.subr.mxu0 0.0
    %427 = vmatpush1.msra.mxu0 %v81
    %428 = vmatprep.subr.mxu0 0.0
    %429 = vmatpush1.msra.mxu0 %v80
    %430 = vmatprep.subr.mxu0 0.0
    %431 = vmatpush1.msra.mxu0 %v79
    %432 = vmatprep.subr.mxu0 0.0
    %433 = vmatpush1.msra.mxu0 %v78
    %434 = vmatprep.subr.mxu0 0.0
    %435 = vmatpush1.msra.mxu0 %v77
    %436 = vmatprep.subr.mxu0 0.0
    %437 = vmatpush2.msra.mxu0 0.0
    %438 = vmatprep.subr.mxu0 0.0
    %439 = vmatpush2.msra.mxu0 0.0
    %440 = vmatprep.subr.mxu0 0.0
    %441 = vmatpush2.msra.mxu0 0.0
    %442 = vmatprep.subr.mxu0 0.0
    %443 = vmatpush2.msra.mxu0 0.0
    %444 = vmatprep.subr.mxu0 0.0
    %445 = vmatpush2.msra.mxu0 0.0
    %446 = vmatprep.subr.mxu0 0.0
    %447 = vmatpush2.msra.mxu0 0.0
    %448 = vmatprep.subr.mxu0 0.0
    %449 = vmatpush2.msra.mxu0 0.0
    %450 = vmatprep.subr.mxu0 0.0
    %451 = vmatpush2.msra.mxu0 0.0
    %452 = vmatprep.subr.mxu0 0.0
    %453 = vmatpush2.msra.mxu0 0.0
    %454 = vmatprep.subr.mxu0 0.0
    %455 = vmatpush2.msra.mxu0 0.0
    %456 = vmatprep.subr.mxu0 0.0
    %457 = vmatpush2.msra.mxu0 0.0
    %458 = vmatprep.subr.mxu0 0.0
    %459 = vmatpush2.msra.mxu0 0.0
    %460 = vmatprep.subr.mxu0 0.0
    %461 = vmatpush2.msra.mxu0 0.0
    %462 = vmatprep.subr.mxu0 0.0
    %463 = vmatpush2.msra.mxu0 0.0
    %464 = vmatprep.subr.mxu0 0.0
    %465 = vmatpush2.msra.mxu0 0.0
    %466 = vmatprep.subr.mxu0 0.0
    %467 = vmatpush2.msra.mxu0 0.0
    %468 = vmatprep.mubr.f32.mxu0 0.0
    %469 = vmatmul.mubr.f32.gmra.mxu0 %v396
    %v470 = vpop.f32.mrf.mxu0
    %v471 = vadd.f32 %v90, %v470
    %v472 = vpop.f32.mrf.mxu0
    %473 = vmatprep.mubr.f32.mxu0 0.0
    %474 = vmatmul.mubr.f32.gmra.mxu0 %v398
    %v475 = vpop.f32.mrf.mxu0
    %v476 = vadd.f32 %v90, %v475
    %v477 = vpop.f32.mrf.mxu0
    %478 = vmatprep.mubr.f32.mxu0 0.0
    %479 = vmatmul.mubr.f32.gmra.mxu0 %v400
    %v480 = vpop.f32.mrf.mxu0
    %v481 = vadd.f32 %v90, %v480
    %v482 = vpop.f32.mrf.mxu0
    %483 = vmatprep.mubr.f32.mxu0 0.0
    %484 = vmatmul.mubr.f32.gmra.mxu0 %v402
    %v485 = vpop.f32.mrf.mxu0
    %v486 = vadd.f32 %v90, %v485
    %v487 = vpop.f32.mrf.mxu0
    %488 = vdwg.mxu0
    %v490 = vsel %vm92, %v63, 0
    %v493 = vsel %vm92, %v67, 0
    %v496 = vsel %vm92, %v71, 0
    %v499 = vsel %vm92, %v75, 0
    %501 = vmatprep.subr.mxu0 0.0
    %502 = vmatpush1.msra.mxu0 0.0
    %503 = vmatprep.subr.mxu0 0.0
    %504 = vmatpush1.msra.mxu0 0.0
    %505 = vmatprep.subr.mxu0 0.0
    %506 = vmatpush1.msra.mxu0 0.0
    %507 = vmatprep.subr.mxu0 0.0
    %508 = vmatpush1.msra.mxu0 0.0
    %509 = vmatprep.subr.mxu0 0.0
    %510 = vmatpush1.msra.mxu0 0.0
    %511 = vmatprep.subr.mxu0 0.0
    %512 = vmatpush1.msra.mxu0 0.0
    %513 = vmatprep.subr.mxu0 0.0
    %514 = vmatpush1.msra.mxu0 0.0
    %515 = vmatprep.subr.mxu0 0.0
    %516 = vmatpush1.msra.mxu0 0.0
    %517 = vmatprep.subr.mxu0 0.0
    %518 = vmatpush1.msra.mxu0 %v84
    %519 = vmatprep.subr.mxu0 0.0
    %520 = vmatpush1.msra.mxu0 %v83
    %521 = vmatprep.subr.mxu0 0.0
    %522 = vmatpush1.msra.mxu0 %v82
    %523 = vmatprep.subr.mxu0 0.0
    %524 = vmatpush1.msra.mxu0 %v81
    %525 = vmatprep.subr.mxu0 0.0
    %526 = vmatpush1.msra.mxu0 %v80
    %527 = vmatprep.subr.mxu0 0.0
    %528 = vmatpush1.msra.mxu0 %v79
    %529 = vmatprep.subr.mxu0 0.0
    %530 = vmatpush1.msra.mxu0 %v78
    %531 = vmatprep.subr.mxu0 0.0
    %532 = vmatpush1.msra.mxu0 %v77
    %533 = vmatprep.subr.mxu0 0.0
    %534 = vmatpush2.msra.mxu0 0.0
    %535 = vmatprep.subr.mxu0 0.0
    %536 = vmatpush2.msra.mxu0 0.0
    %537 = vmatprep.subr.mxu0 0.0
    %538 = vmatpush2.msra.mxu0 0.0
    %539 = vmatprep.subr.mxu0 0.0
    %540 = vmatpush2.msra.mxu0 0.0
    %541 = vmatprep.subr.mxu0 0.0
    %542 = vmatpush2.msra.mxu0 0.0
    %543 = vmatprep.subr.mxu0 0.0
    %544 = vmatpush2.msra.mxu0 0.0
    %545 = vmatprep.subr.mxu0 0.0
    %546 = vmatpush2.msra.mxu0 0.0
    %547 = vmatprep.subr.mxu0 0.0
    %548 = vmatpush2.msra.mxu0 0.0
    %549 = vmatprep.subr.mxu0 0.0
    %550 = vmatpush2.msra.mxu0 0.0
    %551 = vmatprep.subr.mxu0 0.0
    %552 = vmatpush2.msra.mxu0 0.0
    %553 = vmatprep.subr.mxu0 0.0
    %554 = vmatpush2.msra.mxu0 0.0
    %555 = vmatprep.subr.mxu0 0.0
    %556 = vmatpush2.msra.mxu0 0.0
    %557 = vmatprep.subr.mxu0 0.0
    %558 = vmatpush2.msra.mxu0 0.0
    %559 = vmatprep.subr.mxu0 0.0
    %560 = vmatpush2.msra.mxu0 0.0
    %561 = vmatprep.subr.mxu0 0.0
    %562 = vmatpush2.msra.mxu0 0.0
    %563 = vmatprep.subr.mxu0 0.0
    %564 = vmatpush2.msra.mxu0 0.0
    %565 = vmatprep.mubr.f32.mxu0 0.0
    %566 = vmatmul.mubr.f32.gmra.mxu0 %v490
    %v567 = vpop.f32.mrf.mxu0
    %v568 = vadd.f32 %v90, %v567
    %v569 = vpop.f32.mrf.mxu0
    %570 = vmatprep.mubr.f32.mxu0 0.0
    %571 = vmatmul.mubr.f32.gmra.mxu0 %v493
    %v572 = vpop.f32.mrf.mxu0
    %v573 = vadd.f32 %v90, %v572
    %v574 = vpop.f32.mrf.mxu0
    %575 = vmatprep.mubr.f32.mxu0 0.0
    %576 = vmatmul.mubr.f32.gmra.mxu0 %v496
    %v577 = vpop.f32.mrf.mxu0
    %v578 = vadd.f32 %v90, %v577
    %v579 = vpop.f32.mrf.mxu0
    %580 = vmatprep.mubr.f32.mxu0 0.0
    %581 = vmatmul.mubr.f32.gmra.mxu0 %v499
    %v582 = vpop.f32.mrf.mxu0
    %v583 = vadd.f32 %v90, %v582
    %v584 = vpop.f32.mrf.mxu0
    %585 = vdwg.mxu0
    %586 = vrot.lane.b32.xlu0 %v63, 64
    %v587 = vpop.permute.xlu0 %586
    %588 = vrot.lane.b32.xlu0 %v67, 64
    %v589 = vpop.permute.xlu0 %588
    %590 = vrot.lane.b32.xlu0 %v71, 64
    %v591 = vpop.permute.xlu0 %590
    %592 = vrot.lane.b32.xlu0 %v75, 64
    %v593 = vpop.permute.xlu0 %592
    %v594 = vsel %vm92, %v587, 0
    %v596 = vsel %vm92, %v589, 0
    %v598 = vsel %vm92, %v591, 0
    %v600 = vsel %vm92, %v593, 0
    %602 = vmatprep.subr.mxu0 0.0
    %603 = vmatpush1.msra.mxu0 0.0
    %604 = vmatprep.subr.mxu0 0.0
    %605 = vmatpush1.msra.mxu0 0.0
    %606 = vmatprep.subr.mxu0 0.0
    %607 = vmatpush1.msra.mxu0 0.0
    %608 = vmatprep.subr.mxu0 0.0
    %609 = vmatpush1.msra.mxu0 0.0
    %610 = vmatprep.subr.mxu0 0.0
    %611 = vmatpush1.msra.mxu0 0.0
    %612 = vmatprep.subr.mxu0 0.0
    %613 = vmatpush1.msra.mxu0 0.0
    %614 = vmatprep.subr.mxu0 0.0
    %615 = vmatpush1.msra.mxu0 0.0
    %616 = vmatprep.subr.mxu0 0.0
    %617 = vmatpush1.msra.mxu0 0.0
    %618 = vmatprep.subr.mxu0 0.0
    %619 = vmatpush1.msra.mxu0 %v84
    %620 = vmatprep.subr.mxu0 0.0
    %621 = vmatpush1.msra.mxu0 %v83
    %622 = vmatprep.subr.mxu0 0.0
    %623 = vmatpush1.msra.mxu0 %v82
    %624 = vmatprep.subr.mxu0 0.0
    %625 = vmatpush1.msra.mxu0 %v81
    %626 = vmatprep.subr.mxu0 0.0
    %627 = vmatpush1.msra.mxu0 %v80
    %628 = vmatprep.subr.mxu0 0.0
    %629 = vmatpush1.msra.mxu0 %v79
    %630 = vmatprep.subr.mxu0 0.0
    %631 = vmatpush1.msra.mxu0 %v78
    %632 = vmatprep.subr.mxu0 0.0
    %633 = vmatpush1.msra.mxu0 %v77
    %634 = vmatprep.subr.mxu0 0.0
    %635 = vmatpush2.msra.mxu0 0.0
    %636 = vmatprep.subr.mxu0 0.0
    %637 = vmatpush2.msra.mxu0 0.0
    %638 = vmatprep.subr.mxu0 0.0
    %639 = vmatpush2.msra.mxu0 0.0
    %640 = vmatprep.subr.mxu0 0.0
    %641 = vmatpush2.msra.mxu0 0.0
    %642 = vmatprep.subr.mxu0 0.0
    %643 = vmatpush2.msra.mxu0 0.0
    %644 = vmatprep.subr.mxu0 0.0
    %645 = vmatpush2.msra.mxu0 0.0
    %646 = vmatprep.subr.mxu0 0.0
    %647 = vmatpush2.msra.mxu0 0.0
    %648 = vmatprep.subr.mxu0 0.0
    %649 = vmatpush2.msra.mxu0 0.0
    %650 = vmatprep.subr.mxu0 0.0
    %651 = vmatpush2.msra.mxu0 0.0
    %652 = vmatprep.subr.mxu0 0.0
    %653 = vmatpush2.msra.mxu0 0.0
    %654 = vmatprep.subr.mxu0 0.0
    %655 = vmatpush2.msra.mxu0 0.0
    %656 = vmatprep.subr.mxu0 0.0
    %657 = vmatpush2.msra.mxu0 0.0
    %658 = vmatprep.subr.mxu0 0.0
    %659 = vmatpush2.msra.mxu0 0.0
    %660 = vmatprep.subr.mxu0 0.0
    %661 = vmatpush2.msra.mxu0 0.0
    %662 = vmatprep.subr.mxu0 0.0
    %663 = vmatpush2.msra.mxu0 0.0
    %664 = vmatprep.subr.mxu0 0.0
    %665 = vmatpush2.msra.mxu0 0.0
    %666 = vmatprep.mubr.f32.mxu0 0.0
    %667 = vmatmul.mubr.f32.gmra.mxu0 %v594
    %v668 = vpop.f32.mrf.mxu0
    %v669 = vadd.f32 %v90, %v668
    %v670 = vpop.f32.mrf.mxu0
    %671 = vmatprep.mubr.f32.mxu0 0.0
    %672 = vmatmul.mubr.f32.gmra.mxu0 %v596
    %v673 = vpop.f32.mrf.mxu0
    %v674 = vadd.f32 %v90, %v673
    %v675 = vpop.f32.mrf.mxu0
    %676 = vmatprep.mubr.f32.mxu0 0.0
    %677 = vmatmul.mubr.f32.gmra.mxu0 %v598
    %v678 = vpop.f32.mrf.mxu0
    %v679 = vadd.f32 %v90, %v678
    %v680 = vpop.f32.mrf.mxu0
    %681 = vmatprep.mubr.f32.mxu0 0.0
    %682 = vmatmul.mubr.f32.gmra.mxu0 %v600
    %v683 = vpop.f32.mrf.mxu0
    %v684 = vadd.f32 %v90, %v683
    %v685 = vpop.f32.mrf.mxu0
    %686 = vdwg.mxu0
    %v688 = vsel %vm92, %v64, 0
    %v691 = vsel %vm92, %v68, 0
    %v694 = vsel %vm92, %v72, 0
    %v697 = vsel %vm92, %v76, 0
    %699 = vmatprep.subr.mxu0 0.0
    %700 = vmatpush1.msra.mxu0 0.0
    %701 = vmatprep.subr.mxu0 0.0
    %702 = vmatpush1.msra.mxu0 0.0
    %703 = vmatprep.subr.mxu0 0.0
    %704 = vmatpush1.msra.mxu0 0.0
    %705 = vmatprep.subr.mxu0 0.0
    %706 = vmatpush1.msra.mxu0 0.0
    %707 = vmatprep.subr.mxu0 0.0
    %708 = vmatpush1.msra.mxu0 0.0
    %709 = vmatprep.subr.mxu0 0.0
    %710 = vmatpush1.msra.mxu0 0.0
    %711 = vmatprep.subr.mxu0 0.0
    %712 = vmatpush1.msra.mxu0 0.0
    %713 = vmatprep.subr.mxu0 0.0
    %714 = vmatpush1.msra.mxu0 0.0
    %715 = vmatprep.subr.mxu0 0.0
    %716 = vmatpush1.msra.mxu0 %v84
    %717 = vmatprep.subr.mxu0 0.0
    %718 = vmatpush1.msra.mxu0 %v83
    %719 = vmatprep.subr.mxu0 0.0
    %720 = vmatpush1.msra.mxu0 %v82
    %721 = vmatprep.subr.mxu0 0.0
    %722 = vmatpush1.msra.mxu0 %v81
    %723 = vmatprep.subr.mxu0 0.0
    %724 = vmatpush1.msra.mxu0 %v80
    %725 = vmatprep.subr.mxu0 0.0
    %726 = vmatpush1.msra.mxu0 %v79
    %727 = vmatprep.subr.mxu0 0.0
    %728 = vmatpush1.msra.mxu0 %v78
    %729 = vmatprep.subr.mxu0 0.0
    %730 = vmatpush1.msra.mxu0 %v77
    %731 = vmatprep.subr.mxu0 0.0
    %732 = vmatpush2.msra.mxu0 0.0
    %733 = vmatprep.subr.mxu0 0.0
    %734 = vmatpush2.msra.mxu0 0.0
    %735 = vmatprep.subr.mxu0 0.0
    %736 = vmatpush2.msra.mxu0 0.0
    %737 = vmatprep.subr.mxu0 0.0
    %738 = vmatpush2.msra.mxu0 0.0
    %739 = vmatprep.subr.mxu0 0.0
    %740 = vmatpush2.msra.mxu0 0.0
    %741 = vmatprep.subr.mxu0 0.0
    %742 = vmatpush2.msra.mxu0 0.0
    %743 = vmatprep.subr.mxu0 0.0
    %744 = vmatpush2.msra.mxu0 0.0
    %745 = vmatprep.subr.mxu0 0.0
    %746 = vmatpush2.msra.mxu0 0.0
    %747 = vmatprep.subr.mxu0 0.0
    %748 = vmatpush2.msra.mxu0 0.0
    %749 = vmatprep.subr.mxu0 0.0
    %750 = vmatpush2.msra.mxu0 0.0
    %751 = vmatprep.subr.mxu0 0.0
    %752 = vmatpush2.msra.mxu0 0.0
    %753 = vmatprep.subr.mxu0 0.0
    %754 = vmatpush2.msra.mxu0 0.0
    %755 = vmatprep.subr.mxu0 0.0
    %756 = vmatpush2.msra.mxu0 0.0
    %757 = vmatprep.subr.mxu0 0.0
    %758 = vmatpush2.msra.mxu0 0.0
    %759 = vmatprep.subr.mxu0 0.0
    %760 = vmatpush2.msra.mxu0 0.0
    %761 = vmatprep.subr.mxu0 0.0
    %762 = vmatpush2.msra.mxu0 0.0
    %763 = vmatprep.mubr.f32.mxu0 0.0
    %764 = vmatmul.mubr.f32.gmra.mxu0 %v688
    %v765 = vpop.f32.mrf.mxu0
    %v766 = vadd.f32 %v90, %v765
    %v767 = vpop.f32.mrf.mxu0
    %768 = vmatprep.mubr.f32.mxu0 0.0
    %769 = vmatmul.mubr.f32.gmra.mxu0 %v691
    %v770 = vpop.f32.mrf.mxu0
    %v771 = vadd.f32 %v90, %v770
    %v772 = vpop.f32.mrf.mxu0
    %773 = vmatprep.mubr.f32.mxu0 0.0
    %774 = vmatmul.mubr.f32.gmra.mxu0 %v694
    %v775 = vpop.f32.mrf.mxu0
    %v776 = vadd.f32 %v90, %v775
    %v777 = vpop.f32.mrf.mxu0
    %778 = vmatprep.mubr.f32.mxu0 0.0
    %779 = vmatmul.mubr.f32.gmra.mxu0 %v697
    %v780 = vpop.f32.mrf.mxu0
    %v781 = vadd.f32 %v90, %v780
    %v782 = vpop.f32.mrf.mxu0
    %783 = vdwg.mxu0
    %784 = vrot.lane.b32.xlu0 %v64, 64
    %v785 = vpop.permute.xlu0 %784
    %786 = vrot.lane.b32.xlu0 %v68, 64
    %v787 = vpop.permute.xlu0 %786
    %788 = vrot.lane.b32.xlu0 %v72, 64
    %v789 = vpop.permute.xlu0 %788
    %790 = vrot.lane.b32.xlu0 %v76, 64
    %v791 = vpop.permute.xlu0 %790
    %v792 = vsel %vm92, %v785, 0
    %v794 = vsel %vm92, %v787, 0
    %v796 = vsel %vm92, %v789, 0
    %v798 = vsel %vm92, %v791, 0
    %800 = vmatprep.subr.mxu0 0.0
    %801 = vmatpush1.msra.mxu0 0.0
    %802 = vmatprep.subr.mxu0 0.0
    %803 = vmatpush1.msra.mxu0 0.0
    %804 = vmatprep.subr.mxu0 0.0
    %805 = vmatpush1.msra.mxu0 0.0
    %806 = vmatprep.subr.mxu0 0.0
    %807 = vmatpush1.msra.mxu0 0.0
    %808 = vmatprep.subr.mxu0 0.0
    %809 = vmatpush1.msra.mxu0 0.0
    %810 = vmatprep.subr.mxu0 0.0
    %811 = vmatpush1.msra.mxu0 0.0
    %812 = vmatprep.subr.mxu0 0.0
    %813 = vmatpush1.msra.mxu0 0.0
    %814 = vmatprep.subr.mxu0 0.0
    %815 = vmatpush1.msra.mxu0 0.0
    %816 = vmatprep.subr.mxu0 0.0
    %817 = vmatpush1.msra.mxu0 %v84
    %818 = vmatprep.subr.mxu0 0.0
    %819 = vmatpush1.msra.mxu0 %v83
    %820 = vmatprep.subr.mxu0 0.0
    %821 = vmatpush1.msra.mxu0 %v82
    %822 = vmatprep.subr.mxu0 0.0
    %823 = vmatpush1.msra.mxu0 %v81
    %824 = vmatprep.subr.mxu0 0.0
    %825 = vmatpush1.msra.mxu0 %v80
    %826 = vmatprep.subr.mxu0 0.0
    %827 = vmatpush1.msra.mxu0 %v79
    %828 = vmatprep.subr.mxu0 0.0
    %829 = vmatpush1.msra.mxu0 %v78
    %830 = vmatprep.subr.mxu0 0.0
    %831 = vmatpush1.msra.mxu0 %v77
    %832 = vmatprep.subr.mxu0 0.0
    %833 = vmatpush2.msra.mxu0 0.0
    %834 = vmatprep.subr.mxu0 0.0
    %835 = vmatpush2.msra.mxu0 0.0
    %836 = vmatprep.subr.mxu0 0.0
    %837 = vmatpush2.msra.mxu0 0.0
    %838 = vmatprep.subr.mxu0 0.0
    %839 = vmatpush2.msra.mxu0 0.0
    %840 = vmatprep.subr.mxu0 0.0
    %841 = vmatpush2.msra.mxu0 0.0
    %842 = vmatprep.subr.mxu0 0.0
    %843 = vmatpush2.msra.mxu0 0.0
    %844 = vmatprep.subr.mxu0 0.0
    %845 = vmatpush2.msra.mxu0 0.0
    %846 = vmatprep.subr.mxu0 0.0
    %847 = vmatpush2.msra.mxu0 0.0
    %848 = vmatprep.subr.mxu0 0.0
    %849 = vmatpush2.msra.mxu0 0.0
    %850 = vmatprep.subr.mxu0 0.0
    %851 = vmatpush2.msra.mxu0 0.0
    %852 = vmatprep.subr.mxu0 0.0
    %853 = vmatpush2.msra.mxu0 0.0
    %854 = vmatprep.subr.mxu0 0.0
    %855 = vmatpush2.msra.mxu0 0.0
    %856 = vmatprep.subr.mxu0 0.0
    %857 = vmatpush2.msra.mxu0 0.0
    %858 = vmatprep.subr.mxu0 0.0
    %859 = vmatpush2.msra.mxu0 0.0
    %860 = vmatprep.subr.mxu0 0.0
    %861 = vmatpush2.msra.mxu0 0.0
    %862 = vmatprep.subr.mxu0 0.0
    %863 = vmatpush2.msra.mxu0 0.0
    %864 = vmatprep.mubr.f32.mxu0 0.0
    %865 = vmatmul.mubr.f32.gmra.mxu0 %v792
    %v866 = vpop.f32.mrf.mxu0
    %v867 = vadd.f32 %v90, %v866
    %v868 = vpop.f32.mrf.mxu0
    %869 = vmatprep.mubr.f32.mxu0 0.0
    %870 = vmatmul.mubr.f32.gmra.mxu0 %v794
    %v871 = vpop.f32.mrf.mxu0
    %v872 = vadd.f32 %v90, %v871
    %v873 = vpop.f32.mrf.mxu0
    %874 = vmatprep.mubr.f32.mxu0 0.0
    %875 = vmatmul.mubr.f32.gmra.mxu0 %v796
    %v876 = vpop.f32.mrf.mxu0
    %v877 = vadd.f32 %v90, %v876
    %v878 = vpop.f32.mrf.mxu0
    %879 = vmatprep.mubr.f32.mxu0 0.0
    %880 = vmatmul.mubr.f32.gmra.mxu0 %v798
    %v881 = vpop.f32.mrf.mxu0
    %v882 = vadd.f32 %v90, %v881
    %v883 = vpop.f32.mrf.mxu0
    %884 = vdwg.mxu0
    %889 = vrot.lane.b32.xlu0 %v273, 32
    %v890 = vpop.permute.xlu0 %889
    %891 = vrot.lane.b32.xlu0 %v278, 32
    %v892 = vpop.permute.xlu0 %891
    %893 = vrot.lane.b32.xlu0 %v283, 32
    %v894 = vpop.permute.xlu0 %893
    %895 = vrot.lane.b32.xlu0 %v288, 32
    %v896 = vpop.permute.xlu0 %895
    %905 = vrot.lane.b32.xlu0 %v370, 64
    %v906 = vpop.permute.xlu0 %905
    %907 = vrot.lane.b32.xlu0 %v375, 64
    %v908 = vpop.permute.xlu0 %907
    %909 = vrot.lane.b32.xlu0 %v380, 64
    %v910 = vpop.permute.xlu0 %909
    %911 = vrot.lane.b32.xlu0 %v385, 64
    %v912 = vpop.permute.xlu0 %911
    %921 = vrot.lane.b32.xlu0 %v471, 96
    %v922 = vpop.permute.xlu0 %921
    %923 = vrot.lane.b32.xlu0 %v476, 96
    %v924 = vpop.permute.xlu0 %923
    %925 = vrot.lane.b32.xlu0 %v481, 96
    %v926 = vpop.permute.xlu0 %925
    %927 = vrot.lane.b32.xlu0 %v486, 96
    %v928 = vpop.permute.xlu0 %927
    %937 = vrot.lane.b32.xlu0 %v669, 32
    %v938 = vpop.permute.xlu0 %937
    %939 = vrot.lane.b32.xlu0 %v674, 32
    %v940 = vpop.permute.xlu0 %939
    %941 = vrot.lane.b32.xlu0 %v679, 32
    %v942 = vpop.permute.xlu0 %941
    %943 = vrot.lane.b32.xlu0 %v684, 32
    %v944 = vpop.permute.xlu0 %943
    %953 = vrot.lane.b32.xlu0 %v766, 64
    %v954 = vpop.permute.xlu0 %953
    %955 = vrot.lane.b32.xlu0 %v771, 64
    %v956 = vpop.permute.xlu0 %955
    %957 = vrot.lane.b32.xlu0 %v776, 64
    %v958 = vpop.permute.xlu0 %957
    %959 = vrot.lane.b32.xlu0 %v781, 64
    %v960 = vpop.permute.xlu0 %959
    %969 = vrot.lane.b32.xlu0 %v867, 96
    %v970 = vpop.permute.xlu0 %969
    %971 = vrot.lane.b32.xlu0 %v872, 96
    %v972 = vpop.permute.xlu0 %971
    %973 = vrot.lane.b32.xlu0 %v877, 96
    %v974 = vpop.permute.xlu0 %973
    %975 = vrot.lane.b32.xlu0 %v882, 96
    %v976 = vpop.permute.xlu0 %975
    %vm981 = vcmask 261120
    %v982 = vsel %vm981, %v172, %v890
    %v983 = vsel %vm981, %v177, %v892
    %v984 = vsel %vm981, %v182, %v894
    %v985 = vsel %vm981, %v187, %v896
    %v986 = vsel %vm92, %v982, %v906
    %v987 = vsel %vm92, %v983, %v908
    %v988 = vsel %vm92, %v984, %v910
    %v989 = vsel %vm92, %v985, %v912
    %vm990 = vcmask 785408
    %v991 = vsel %vm990, %v986, %v922
    %v992 = vsel %vm990, %v987, %v924
    %v993 = vsel %vm990, %v988, %v926
    %v994 = vsel %vm990, %v989, %v928
    %v995 = vsel %vm981, %v568, %v938
    %v996 = vsel %vm981, %v573, %v940
    %v997 = vsel %vm981, %v578, %v942
    %v998 = vsel %vm981, %v583, %v944
    %v999 = vsel %vm92, %v995, %v954
    %v1000 = vsel %vm92, %v996, %v956
    %v1001 = vsel %vm92, %v997, %v958
    %v1002 = vsel %vm92, %v998, %v960
    %v1003 = vsel %vm990, %v999, %v970
    %v1004 = vsel %vm990, %v1000, %v972
    %v1005 = vsel %vm990, %v1001, %v974
    %v1006 = vsel %vm990, %v1002, %v976
    %1007 = vst [vmem:[#allocation5] sm:$0xff] %v991
    %1008 = vst [vmem:[#allocation5 + $0x8] sm:$0xff] %v1003
    %1009 = vst [vmem:[#allocation5 + $0x10] sm:$0xff] %v992
    %1010 = vst [vmem:[#allocation5 + $0x18] sm:$0xff] %v1004
    %1011 = vst [vmem:[#allocation5 + $0x20] sm:$0xff] %v993
    %1012 = vst [vmem:[#allocation5 + $0x28] sm:$0xff] %v1005
    %1013 = vst [vmem:[#allocation5 + $0x30] sm:$0xff] %v994
    %1014 = vst [vmem:[#allocation5 + $0x38] sm:$0xff] %v1006
    // Predicated region
    $region18: #{tpu_custom_call.1} parent=1 // pred_check
      _
    $region19: #{tpu_custom_call.1} parent=1 // pred_check_branch
      %1016 = sbr.rel (0) target = $region21
    $region20: #{tpu_custom_call.1} parent=1 // pred_region
      %s1018 = ssub.s32 1024, 1024
      %1019 = vsyncadd [#allocation4], %s1018
      %s1020 = sshll.u32 [#allocation5], 4
      %s1021 = int_to_ptr.vmem [resolvable:$true] %s1020
      %1026 = dma.vmem_to_hbm [thread:$0]  %s1021, 1024, %s3, [#allocation4], 256, 256, 16
    $region21: #{tpu_custom_call.1} parent=1 // pred_fallthru
      _
    // Predicated region
    $region22: #{tpu_custom_call.1} parent=1 // pred_check
      _
    $region23: #{tpu_custom_call.1} parent=1 // pred_check_branch
      %1028 = sbr.rel (0) target = $region25
    $region24: #{tpu_custom_call.1} parent=1 // pred_region
      %1029 = dma.done [#allocation4], 1024
    $region25: #{tpu_custom_call.1} parent=1 // pred_fallthru
      _
    %1030 = vsyncpa [#allocation3], 1
    %1031 = vsyncpa [#allocation4], 1

</llo_original>
